<compile_context>
chip_gen: v7x
topology: tpu7x:2x2x1
jax: 0.10.0
libtpu: 0.0.40
codegen_flags: <defaults>
</compile_context>

<pallas_src>
import functools

import jax
import jax.numpy as jnp
from jax.experimental import pallas as pl
from jax.experimental.pallas import tpu as pltpu


# ---------------------------------------------------------------------------
# In-kernel helpers / kernels
# ---------------------------------------------------------------------------

def _build_taps(x_ref, halo_ref, c_in):
    """Build the (3*C, tm) tap-major patch tile from the even/odd plane layout.

    x_ref   : (2C, tm)  rows 0..C-1 = even plane (tap k=0), rows C..2C-1 = odd plane (tap k=1)
    halo_ref: (2C, 128) the next 128 columns of the same array (right halo)
    tap k=2 for position u is the even plane at position u+1 (last lane comes from the halo).
    """
    p01 = x_ref[...]                                        # (2C, tm)
    nxt = halo_ref[:c_in, 0:1]                              # (C, 1) first halo column, even plane
    p2 = jnp.concatenate([p01[:c_in, 1:], nxt], axis=1)     # (C, tm)  shifted-by-one even plane
    return jnp.concatenate([p01, p2], axis=0)               # (3C, tm) rows: [k=0 | k=1 | k=2]


def _patch_moment_kernel(x_ref, halo_ref, g_ref, *, c_in, tm, l_out):
    """Stats pre-pass: per-tile G @ G^T with G = [taps; ones] (exact BN batch statistics)."""
    p = _build_taps(x_ref, halo_ref, c_in)                  # (CK, tm)
    ones = jnp.ones((1, tm), dtype=p.dtype)
    g = jnp.concatenate([p, ones], axis=0)                  # (CK+1, tm)
    # Mask padded output columns so they do not pollute the batch statistics.
    col = pl.program_id(1) * tm + jax.lax.broadcasted_iota(jnp.int32, g.shape, 1)
    g = jnp.where(col < l_out, g, jnp.zeros_like(g))
    g_ref[...] = jnp.einsum("ct,dt->cd", g, g, preferred_element_type=jnp.float32)


def _conv_bn_prelu_kernel(w_ref, scale_ref, shift_ref, alpha_ref, x_ref, halo_ref, o_ref, *,
                          c_in):
    """Main pass (BN path): conv matmul + folded BatchNorm affine + PReLU, NCL output tile."""
    p = _build_taps(x_ref, halo_ref, c_in)                  # (CK, tm)
    y = jnp.dot(w_ref[...], p, preferred_element_type=jnp.float32)   # (Cout, tm)
    y = y * scale_ref[...] + shift_ref[...]
    a = alpha_ref[0]                                        # scalar PReLU slope from SMEM
    o_ref[...] = jnp.where(y > 0, y, a * y)


def _conv_bias_kernel(w_ref, b_ref, x_ref, halo_ref, o_ref, *, c_in):
    """`last=True` path: conv + bias only, NCL output tile."""
    p = _build_taps(x_ref, halo_ref, c_in)
    o_ref[...] = jnp.dot(w_ref[...], p, preferred_element_type=jnp.float32) + b_ref[...]


# ---------------------------------------------------------------------------
# Wrapper
# ---------------------------------------------------------------------------

def _round_up(x, m):
    return (x + m - 1) // m * m


def _cdiv(a, b):
    return -(-a // b)


def conv1d_forward(x, w_v, w_g, b, gamma, beta, alpha, *,
                   stride=2, padding=1, last=False, tile_cols=32768,
                   eps=1e-5, compute_dtype=jnp.float32):
    """x: (N, C_in, L) float32.  Returns (N, C_out, L_out) float32."""
    f32 = jnp.float32
    N, C, L = x.shape
    Cout, C_in, K = w_v.shape
    assert C_in == C and K == 3 and stride == 2, "kernel specialized to kernel_size=3, stride=2"
    CK = C * K
    two_c = 2 * C

    # weight_norm (dim=0): w = g * v / ||v||, norm over (in_channels, kernel) per out channel.
    v_norm = jnp.sqrt(jnp.sum(jnp.square(w_v), axis=(1, 2), keepdims=True))
    w = w_g * w_v / v_norm                                            # (Cout, C, K)
    # Tap-major (k-major) flattening to match the in-kernel tap stacking order.
    w_mat = jnp.transpose(w, (0, 2, 1)).reshape(Cout, CK).astype(f32)
    w_c = w_mat.astype(compute_dtype)

    L_out = (L + 2 * padding - K) // stride + 1

    # ---- tile sizing: big lane tiles, never crossing batch boundaries, grid >= 2 steps ----
    tc = max(128, _round_up(int(tile_cols), 128))
    n_t = max(1, _cdiv(L_out, tc))
    if N == 1 and n_t == 1 and L_out > 128:
        n_t = 2                                   # keep both v7x TensorCores busy
    tm = _round_up(_cdiv(L_out, n_t), 128)
    J = _cdiv(L_out, tm)                          # position tiles per batch item
    Lp_out = J * tm

    # ---- even/odd plane layout of the padded input (single fused XLA copy of x) ----------
    x_pad = jnp.pad(x, ((0, 0), (0, 0), (padding, padding)))
    Lh = Lp_out + 128                             # +128 lane-aligned right halo for the last tile
    plane0 = jax.lax.slice_in_dim(x_pad, 0, 2 * L_out + 1, 2, axis=2)   # (N, C, L_out + 1)
    plane1 = jax.lax.slice_in_dim(x_pad, 1, 2 * L_out, 2, axis=2)       # (N, C, L_out)
    xeo = jnp.concatenate(
        [jnp.pad(plane0, ((0, 0), (0, 0), (0, Lh - plane0.shape[2]))),
         jnp.pad(plane1, ((0, 0), (0, 0), (0, Lh - plane1.shape[2])))],
        axis=1).astype(compute_dtype)             # (N, 2C, Lh), zero-padded (stats-neutral)

    # ---- specs -----------------------------------------------------------------------------
    halo_blocks = tm // 128
    x_spec = pl.BlockSpec((None, two_c, tm), lambda n, j: (n, 0, j))
    halo_spec = pl.BlockSpec((None, two_c, 128), lambda n, j: (n, 0, (j + 1) * halo_blocks))
    w_spec = pl.BlockSpec((Cout, CK), lambda n, j: (0, 0))
    col_spec = pl.BlockSpec((Cout, 1), lambda n, j: (0, 0))
    out_spec = pl.BlockSpec((None, Cout, tm), lambda n, j: (n, 0, j))
    smem_spec = pl.BlockSpec(memory_space=pltpu.MemorySpace.SMEM)

    cb = jnp.dtype(compute_dtype).itemsize
    vmem_bytes = int(2 * (two_c * (tm + 128) * cb + Cout * tm * 4)
                     + Cout * CK * cb + (2 << 20))
    vmem_bytes = min(max(vmem_bytes, 8 << 20), 48 << 20)
    cparams = pltpu.CompilerParams(dimension_semantics=("parallel", "parallel"),
                                   vmem_limit_bytes=vmem_bytes)

    cols_total = N * Lp_out
    cost_main = pl.CostEstimate(
        flops=2 * Cout * CK * cols_total + 6 * Cout * cols_total,
        transcendentals=0,
        bytes_accessed=cb * two_c * N * Lh + 4 * Cout * cols_total + 4 * Cout * (CK + 4))

    if last:
        out_p = pl.pallas_call(
            functools.partial(_conv_bias_kernel, c_in=C),
            grid=(N, J),
            in_specs=[w_spec, col_spec, x_spec, halo_spec],
            out_specs=out_spec,
            out_shape=jax.ShapeDtypeStruct((N, Cout, Lp_out), f32),
            compiler_params=cparams,
            cost_estimate=cost_main,
        )(w_c, b.reshape(Cout, 1).astype(f32), xeo, xeo)
    else:
        # ---- pass 1: exact BN statistics from the patch second-moment matrix -------------
        CK1 = CK + 1
        cost_stats = pl.CostEstimate(
            flops=2 * CK1 * CK1 * cols_total,
            transcendentals=0,
            bytes_accessed=cb * two_c * N * Lh + 4 * N * J * CK1 * CK1)
        g_tiles = pl.pallas_call(
            functools.partial(_patch_moment_kernel, c_in=C, tm=tm, l_out=L_out),
            grid=(N, J),
            in_specs=[x_spec, halo_spec],
            out_specs=pl.BlockSpec((None, None, CK1, CK1), lambda n, j: (n, j, 0, 0)),
            out_shape=jax.ShapeDtypeStruct((N, J, CK1, CK1), f32),
            compiler_params=cparams,
            cost_estimate=cost_stats,
        )(xeo, xeo)

        gsum = jnp.sum(g_tiles, axis=(0, 1))                  # (CK+1, CK+1)
        m2 = gsum[:CK, :CK]                                   # sum_t p p^T
        s1 = gsum[:CK, CK]                                    # sum_t p
        cnt = jnp.float32(N * L_out)                          # true count (excludes padding)
        # Conv bias omitted: BN's mean subtraction cancels it exactly.
        mean = (w_mat @ s1) / cnt                             # (Cout,)
        e2 = jnp.sum((w_mat @ m2) * w_mat, axis=1) / cnt
        # NOTE: E[y^2]-mean^2 in f32 — fine at BN activation scales; switch to a centered
        # accumulation if activations ever become huge (flagged in review).
        var = jnp.maximum(e2 - mean * mean, 0.0)
        scale = gamma.astype(f32) * jax.lax.rsqrt(var + eps)
        shift = beta.astype(f32) - mean * scale

        # ---- pass 2 (fused main pass): conv + folded BN affine + PReLU, NCL output -------
        out_p = pl.pallas_call(
            functools.partial(_conv_bn_prelu_kernel, c_in=C),
            grid=(N, J),
            in_specs=[w_spec, col_spec, col_spec, smem_spec, x_spec, halo_spec],
            out_specs=out_spec,
            out_shape=jax.ShapeDtypeStruct((N, Cout, Lp_out), f32),
            compiler_params=cparams,
            cost_estimate=cost_main,
        )(w_c, scale.reshape(Cout, 1), shift.reshape(Cout, 1),
          jnp.reshape(alpha, (1,)).astype(f32), xeo, xeo)

    # Only a cheap slice remains (no transpose); it disappears when L_out % tm == 0.
    return out_p if Lp_out == L_out else out_p[:, :, :L_out]


# ---------------------------------------------------------------------------
# Pure-JAX reference (training-mode BatchNorm, matching the PyTorch module)
# ---------------------------------------------------------------------------

def _reference_forward(x, w_v, w_g, b, gamma, beta, alpha, *,
                       stride=2, padding=1, last=False):
    v_norm = jnp.sqrt(jnp.sum(jnp.square(w_v), axis=(1, 2), keepdims=True))
    w = w_g * w_v / v_norm
    y = jax.lax.conv_general_dilated(
        x, w, window_strides=(stride,), padding=[(padding, padding)],
        dimension_numbers=("NCH", "OIH", "NCH"))
    y = y + b[None, :, None]
    if last:
        return y
    mean = jnp.mean(y, axis=(0, 2), keepdims=True)
    var = jnp.mean(jnp.square(y - mean), axis=(0, 2), keepdims=True)
    y = (y - mean) * jax.lax.rsqrt(var + 1e-5)
    y = y * gamma[None, :, None] + beta[None, :, None]
    return jnp.where(y > 0, y, alpha * y)


if __name__ == "__main__":
    key = jax.random.PRNGKey(0)
    kx, kv, kg, kb, kx2 = jax.random.split(key, 5)

    C_in, C_out = 4, 8
    w_v = jax.random.normal(kv, (C_out, C_in, 3), dtype=jnp.float32) * 0.5
    w_g = jax.random.uniform(kg, (C_out, 1, 1), dtype=jnp.float32, minval=0.5, maxval=1.5)
    b = jax.random.normal(kb, (C_out,), dtype=jnp.float32) * 0.1
    gamma = jnp.ones((C_out,), dtype=jnp.float32)     # BatchNorm1d defaults
    beta = jnp.zeros((C_out,), dtype=jnp.float32)
    alpha = jnp.float32(0.25)                         # PReLU default init

    # ---- small case consistent with the module: batch=2, n_channels=4, length=16 ---------
    x = jax.random.normal(kx, (2, C_in, 16), dtype=jnp.float32)
    out = jax.block_until_ready(conv1d_forward(x, w_v, w_g, b, gamma, beta, alpha))
    ref = _reference_forward(x, w_v, w_g, b, gamma, beta, alpha)
    assert out.shape == (2, C_out, 8)
    assert jnp.allclose(out, ref, atol=2e-3, rtol=2e-3), "BN/PReLU path mismatch (small)"

    out_last = jax.block_until_ready(
        conv1d_forward(x, w_v, w_g, b, gamma, beta, alpha, last=True))
    ref_last = _reference_forward(x, w_v, w_g, b, gamma, beta, alpha, last=True)
    assert jnp.allclose(out_last, ref_last, atol=2e-3, rtol=2e-3), "last path mismatch (small)"

    # ---- multi-tile case: exercises tile halos, stats masking and the L_out slice --------
    x2 = jax.random.normal(kx2, (2, C_in, 1000), dtype=jnp.float32)
    out2 = jax.block_until_ready(
        conv1d_forward(x2, w_v, w_g, b, gamma, beta, alpha, tile_cols=128))
    ref2 = _reference_forward(x2, w_v, w_g, b, gamma, beta, alpha)
    assert out2.shape == (2, C_out, 500)
    assert jnp.allclose(out2, ref2, atol=2e-3, rtol=2e-3), "BN/PReLU path mismatch (tiled)"

    out2l = jax.block_until_ready(
        conv1d_forward(x2, w_v, w_g, b, gamma, beta, alpha, tile_cols=128, last=True))
    ref2l = _reference_forward(x2, w_v, w_g, b, gamma, beta, alpha, last=True)
    assert jnp.allclose(out2l, ref2l, atol=2e-3, rtol=2e-3), "last path mismatch (tiled)"

    # ---- opt-in bf16 matmul inputs (looser tolerance; BN/affine math stays f32) ----------
    out_bf = jax.block_until_ready(
        conv1d_forward(x2, w_v, w_g, b, gamma, beta, alpha, compute_dtype=jnp.bfloat16))
    assert jnp.allclose(out_bf, ref2, atol=5e-2, rtol=5e-2), "bf16 path mismatch"

    print("KERNEL_OK")
</pallas_src>

<mosaic_0001>
module attributes {stable_mosaic.version = 11 : i64} {
  func.func @_patch_moment_kernel(%arg0: i32, %arg1: i32, %arg2: memref<1x8x128xf32, #tpu.memory_space<vmem>>, %arg3: memref<1x8x128xf32, #tpu.memory_space<vmem>>, %arg4: memref<1x1x13x13xf32, #tpu.memory_space<vmem>>) attributes {dimension_semantics = [#tpu.dimension_semantics<parallel>, #tpu.dimension_semantics<parallel>], iteration_bounds = array<i64: 2, 1>, scalar_prefetch = 0 : i64, scratch_operands = 0 : i64, tpu.core_type = #tpu.core_type<tc>, window_params = [{transform_indices = @transform_0, window_bounds = array<i64: 1, 8, 128>}, {transform_indices = @transform_1, window_bounds = array<i64: 1, 8, 128>}, {transform_indices = @transform_2, window_bounds = array<i64: 1, 1, 13, 13>}]} {
    %c0 = arith.constant 0 : index
    %c0_0 = arith.constant 0 : index
    %c0_1 = arith.constant 0 : index
    %0 = vector.load %arg2[%c0, %c0_0, %c0_1] : memref<1x8x128xf32, #tpu.memory_space<vmem>>, vector<1x8x128xf32>
    %1 = vector.shape_cast %0 : vector<1x8x128xf32> to vector<8x128xf32>
    %c0_2 = arith.constant 0 : index
    %c0_3 = arith.constant 0 : index
    %c0_4 = arith.constant 0 : index
    %2 = vector.load %arg3[%c0_2, %c0_3, %c0_4] : memref<1x8x128xf32, #tpu.memory_space<vmem>>, vector<1x4x1xf32>
    %3 = vector.shape_cast %2 : vector<1x4x1xf32> to vector<4x1xf32>
    %4 = vector.extract_strided_slice %1 {offsets = [0, 1], sizes = [4, 127], strides = [1, 1]} : vector<8x128xf32> to vector<4x127xf32>
    %5 = tpu.concatenate %4, %3 in 1 : vector<4x127xf32>, vector<4x1xf32> -> vector<4x128xf32>
    %6 = tpu.concatenate %1, %5 in 0 : vector<8x128xf32>, vector<4x128xf32> -> vector<12x128xf32>
    %cst = arith.constant 1.000000e+00 : f32
    %7 = vector.broadcast %cst : f32 to vector<1x128xf32>
    %8 = tpu.concatenate %6, %7 in 0 : vector<12x128xf32>, vector<1x128xf32> -> vector<13x128xf32>
    %c128_i32 = arith.constant 128 : i32
    %9 = arith.muli %arg1, %c128_i32 : i32
    %10 = tpu.iota {dimensions = array<i32: 1>} : vector<13x128xi32>
    %11 = vector.broadcast %9 : i32 to vector<13x128xi32>
    %12 = arith.addi %11, %10 : vector<13x128xi32>
    %c8_i32 = arith.constant 8 : i32
    %13 = vector.broadcast %c8_i32 : i32 to vector<13x128xi32>
    %14 = arith.cmpi slt, %12, %13 : vector<13x128xi32>
    %cst_5 = arith.constant 0.000000e+00 : f32
    %15 = vector.broadcast %cst_5 : f32 to vector<13x128xf32>
    %16 = arith.select %14, %8, %15 : vector<13x128xi1>, vector<13x128xf32>
    "tpu.trace_start"() <{level = 10 : i32, message = "ct,dt->cd"}> : () -> ()
    %cst_6 = arith.constant dense<0.000000e+00> : vector<13x13xf32>
    %17 = tpu.matmul %16, %16, %cst_6 {dimension_numbers = #tpu.dot_dimension_numbers<[1], [1], [0], [0], [0, 0, 1, 0], [], []>} : vector<13x128xf32>, vector<13x128xf32>, vector<13x13xf32> -> vector<13x13xf32>
    "tpu.trace_stop"() : () -> ()
    %c0_7 = arith.constant 0 : index
    %c0_8 = arith.constant 0 : index
    %c0_9 = arith.constant 0 : index
    %c0_10 = arith.constant 0 : index
    %18 = vector.load %arg4[%c0_7, %c0_8, %c0_9, %c0_10] : memref<1x1x13x13xf32, #tpu.memory_space<vmem>>, vector<1x1x13x13xf32>
    %19 = vector.shape_cast %18 : vector<1x1x13x13xf32> to vector<13x13xf32>
    %20 = vector.shape_cast %17 : vector<13x13xf32> to vector<1x1x13x13xf32>
    tpu.vector_store %arg4[%c0_7, %c0_8, %c0_9, %c0_10], %20 {strides = array<i32>} : memref<1x1x13x13xf32, #tpu.memory_space<vmem>>, vector<1x1x13x13xf32>,
    return
  }
  func.func @transform_0(%arg0: i32, %arg1: i32) -> (i32, i32, i32) {
    %c0_i32 = arith.constant 0 : i32
    %c0_i32_0 = arith.constant 0 : i32
    return %arg0, %c0_i32, %arg1 : i32, i32, i32
  }
  func.func @transform_1(%arg0: i32, %arg1: i32) -> (i32, i32, i32) {
    %c1_i32 = arith.constant 1 : i32
    %0 = arith.addi %arg1, %c1_i32 : i32
    %c1_i32_0 = arith.constant 1 : i32
    %1 = arith.muli %0, %c1_i32_0 : i32
    %c0_i32 = arith.constant 0 : i32
    %c0_i32_1 = arith.constant 0 : i32
    return %arg0, %c0_i32, %1 : i32, i32, i32
  }
  func.func @transform_2(%arg0: i32, %arg1: i32) -> (i32, i32, i32, i32) {
    %c0_i32 = arith.constant 0 : i32
    %c0_i32_0 = arith.constant 0 : i32
    %c0_i32_1 = arith.constant 0 : i32
    return %arg0, %arg1, %c0_i32, %c0_i32_0 : i32, i32, i32, i32
  }
}

</mosaic_0001>

<llo_original>
// kernel: tpu_custom_call.1
$region0: #{tpu_custom_call.1}
  #allocation0 [shape = 'u32[]', space=smem, size = 0x4, offset = 0x4, fixed_abs, tag = 'smem constant byte address 0x4 - core index']
  #allocation1 [shape = 'u32[144,128]{1,0:T(1,128)}', space=vmem, size = 0x12000, scoped, tag = 'internal scratch']
  %s0 = inlined_call_operand.hbm [shape: f32[2,8,256], index: 0, kind: input, shape index: {}]
  %s1 = inlined_call_operand.hbm [shape: f32[2,8,256], index: 1, kind: input, shape index: {}]
  %s2 = inlined_call_operand.vmem [shape: f32[2,1,13,13], index: 2, kind: output, shape index: {}]
  %s3 = sld [smem:[#allocation0]]
  $region49: #{tpu_custom_call.1} parent=0
    _
  %s5 = ssub.s32 1, %s3
  %s6 = scalar_select 0, %s5, %s3
  $region1: #{tpu_custom_call.1} parent=0
    #allocation2 [shape = 'u8[8192]{0}', space=vmem, size = 0x2000, scoped, tag = 'input window, operand 0']
    #allocation3 [shape = 's32[2]{0}', space=sflag, size = 0x8, scoped, tag = 'scoped memory for tpu_custom_call.1']
    #allocation4 [shape = 'u8[8192]{0}', space=vmem, size = 0x2000, scoped, tag = 'input window, operand 1']
    #allocation5 [shape = 's32[2]{0}', space=sflag, size = 0x8, scoped, tag = 'scoped memory for tpu_custom_call.1']
    %7 = vsyncpa [#allocation3], 0
    %s8 = scalar_lea.sflag [#allocation3], 1
    %9 = vsyncpa %s8, 0
    %10 = vsyncpa [#allocation5], 0
    %s11 = scalar_lea.sflag [#allocation5], 1
    %12 = vsyncpa %s11, 0
    loop: start=0, step=1, limit=4
    $region2: #{tpu_custom_call.1} parent=1 // loop_pre_header
      _
    $region3: #{tpu_custom_call.1} parent=1 // loop_header
      %s14 = sphi 0, %s18
      %p15 = scmp.ge.s32.totalorder %s14, 4
      %s21 = sphi 0, %s33
      %s22 = sphi 0, %s29
      %s23 = sphi 0, %s21
      %s24 = sphi 0, %s22
      %s25 = sphi 0, %s23
      %s26 = sphi 0, %s24
      %s38 = sphi 0, %s40
      %s41 = sphi 0, %s38
      %s42 = sphi 0, %s41
      %s58 = sphi 0, %s42
      %s68 = sphi 0, %s70
      %s71 = sphi 0, %s68
      %s72 = sphi 0, %s71
      %s88 = sphi 0, %s72
      %s96 = sphi 0, %s98
      %s99 = sphi 0, %s96
      %s100 = sphi 0, %s99
      %s116 = sphi 0, %s100
    $region4: #{tpu_custom_call.1} parent=1 // loop_header_branch
      %17 = sbr.rel (%p15) target = $region8
    $region5: #{tpu_custom_call.1} parent=1 // loop_body
      %s19 = ssub.s32 %s14, 1
      %s20 = ssub.s32 %s14, 2
      %s27 = sadd.s32 1, %s22
      %p28 = scmp.ge.s32.totalorder %s27, 1
      %s29 = scalar_select %p28, 0, %s27
      %s30 = sadd.s32 1, %s21
      %s31 = scalar_select %p28, %s30, %s21
      %p32 = scmp.ge.s32.totalorder %s31, 2
      %s33 = scalar_select %p32, 0, %s31
      %s34 = ssub.s32 %s21, %s33
      %s35 = ssub.s32 %s22, %s29
      %s36 = sor.u32 %s34, %s35
      %p37 = scmp.eq.s32.totalorder %s36, 0
      %s39 = sadd.s32 %s38, 1
      %s40 = scalar_select %p37, %s38, %s39
      %p43 = pneg %p37
      %p44 = scmp.eq.s32.totalorder %s14, 1
      %p45 = por %p43, %p44
      %p46 = scmp.ne.s32.totalorder %s38, %s41
      %p47 = scmp.eq.s32.totalorder %s14, 0
      %p48 = por %p46, %p47
      %p49 = scmp.ne.s32.totalorder %s38, %s41
      %p50 = scmp.eq.s32.totalorder %s19, 1
      %p51 = por %p49, %p50
      %p52 = scmp.ne.s32.totalorder %s41, %s42
      %p53 = scmp.eq.s32.totalorder %s19, 0
      %p54 = por %p52, %p53
      %p55 = scmp.ne.s32.totalorder %s41, %s42
      %p56 = scmp.eq.s32.totalorder %s20, 1
      %p57 = por %p55, %p56
      %p59 = scmp.ne.s32.totalorder %s42, %s58
      %p60 = scmp.eq.s32.totalorder %s20, 0
      %p61 = por %p59, %p60
      %s62 = sadd.s32 %s22, 1
      %s63 = sadd.s32 %s29, 1
      %s64 = ssub.s32 %s21, %s33
      %s65 = ssub.s32 %s62, %s63
      %s66 = sor.u32 %s64, %s65
      %p67 = scmp.eq.s32.totalorder %s66, 0
      %s69 = sadd.s32 %s68, 1
      %s70 = scalar_select %p67, %s68, %s69
      %p73 = pneg %p67
      %p74 = scmp.eq.s32.totalorder %s14, 1
      %p75 = por %p73, %p74
      %p76 = scmp.ne.s32.totalorder %s68, %s71
      %p77 = scmp.eq.s32.totalorder %s14, 0
      %p78 = por %p76, %p77
      %p79 = scmp.ne.s32.totalorder %s68, %s71
      %p80 = scmp.eq.s32.totalorder %s19, 1
      %p81 = por %p79, %p80
      %p82 = scmp.ne.s32.totalorder %s71, %s72
      %p83 = scmp.eq.s32.totalorder %s19, 0
      %p84 = por %p82, %p83
      %p85 = scmp.ne.s32.totalorder %s71, %s72
      %p86 = scmp.eq.s32.totalorder %s20, 1
      %p87 = por %p85, %p86
      %p89 = scmp.ne.s32.totalorder %s72, %s88
      %p90 = scmp.eq.s32.totalorder %s20, 0
      %p91 = por %p89, %p90
      %s92 = ssub.s32 %s21, %s33
      %s93 = ssub.s32 %s22, %s29
      %s94 = sor.u32 %s92, %s93
      %p95 = scmp.eq.s32.totalorder %s94, 0
      %s97 = sadd.s32 %s96, 1
      %s98 = scalar_select %p95, %s96, %s97
      %p101 = pneg %p95
      %p102 = scmp.eq.s32.totalorder %s14, 1
      %p103 = por %p101, %p102
      %p104 = scmp.ne.s32.totalorder %s96, %s99
      %p105 = scmp.eq.s32.totalorder %s14, 0
      %p106 = por %p104, %p105
      %p107 = scmp.ne.s32.totalorder %s96, %s99
      %p108 = scmp.eq.s32.totalorder %s19, 1
      %p109 = por %p107, %p108
      %p110 = scmp.ne.s32.totalorder %s99, %s100
      %p111 = scmp.eq.s32.totalorder %s19, 0
      %p112 = por %p110, %p111
      %p113 = scmp.ne.s32.totalorder %s99, %s100
      %p114 = scmp.eq.s32.totalorder %s20, 1
      %p115 = por %p113, %p114
      %p117 = scmp.ne.s32.totalorder %s100, %s116
      %p118 = scmp.eq.s32.totalorder %s20, 0
      %p119 = por %p117, %p118
      %p120 = scmp.le.s32.totalorder 1, %s14
      %p121 = scmp.lt.s32.totalorder %s14, 3
      %p122 = pnand %p120, %p121
      %p123 = pneg %p122
      // Predicated region
      $region9: #{tpu_custom_call.1} parent=5 // pred_check
        _
      $region10: #{tpu_custom_call.1} parent=5 // pred_check_branch
        %125 = sbr.rel (%p122) target = $region12
      $region11: #{tpu_custom_call.1} parent=5 // pred_region
        %s126 = ssub.s32 %s14, 1
      $region12: #{tpu_custom_call.1} parent=5 // pred_fallthru
        _
      %p127 = scmp.lt.s32.totalorder %s14, 2
      // Predicated region
      $region13: #{tpu_custom_call.1} parent=5 // pred_check
        %p128 = pneg %p127
      $region14: #{tpu_custom_call.1} parent=5 // pred_check_branch
        %130 = sbr.rel (%p128) target = $region16
      $region15: #{tpu_custom_call.1} parent=5 // pred_region
        // Predicated region
        $region17: #{tpu_custom_call.1} parent=15 // pred_check
          %p131 = pneg %p48
        $region18: #{tpu_custom_call.1} parent=15 // pred_check_branch
          %133 = sbr.rel (%p131) target = $region20
        $region19: #{tpu_custom_call.1} parent=15 // pred_region
          %s134 = sand.u32 %s38, 1
          %s135 = scalar_lea.sflag [#allocation3], %s134
          %s136 = sand.u32 %s38, 1
          %s137 = smul.addr %s136, 8
          %s138 = scalar_lea.vmem [#allocation2], %s137
          %s140 = ssub.s32 128, 128
          %141 = vsyncadd %s135, %s140
          %s142 = smul.addr %s21, 2
          %s143 = sadd.s32 %s22, %s142
          %s144 = smul.addr %s143, 128
          %s145 = scalar_lea.hbm %s0, %s144
          %s147 = sshll.u32 %s138, 4
          %s148 = int_to_ptr.vmem [resolvable:$true] %s147
          %150 = dma.hbm_to_vmem [thread:$0]  %s145, 128, %s148, %s135
        $region20: #{tpu_custom_call.1} parent=15 // pred_fallthru
          _
        // Predicated region
        $region21: #{tpu_custom_call.1} parent=15 // pred_check
          %p151 = pneg %p78
        $region22: #{tpu_custom_call.1} parent=15 // pred_check_branch
          %153 = sbr.rel (%p151) target = $region24
        $region23: #{tpu_custom_call.1} parent=15 // pred_region
          %s154 = sand.u32 %s68, 1
          %s155 = scalar_lea.sflag [#allocation5], %s154
          %s156 = sand.u32 %s68, 1
          %s157 = smul.addr %s156, 8
          %s158 = scalar_lea.vmem [#allocation4], %s157
          %s159 = sadd.s32 %s22, 1
          %s161 = ssub.s32 128, 128
          %162 = vsyncadd %s155, %s161
          %s163 = smul.addr %s21, 2
          %s164 = sadd.s32 %s159, %s163
          %s165 = smul.addr %s164, 128
          %s166 = scalar_lea.hbm %s1, %s165
          %s168 = sshll.u32 %s158, 4
          %s169 = int_to_ptr.vmem [resolvable:$true] %s168
          %171 = dma.hbm_to_vmem [thread:$0]  %s166, 128, %s169, %s155
        $region24: #{tpu_custom_call.1} parent=15 // pred_fallthru
          _
      $region16: #{tpu_custom_call.1} parent=5 // pred_fallthru
        _
      %p172 = scmp.le.s32.totalorder 1, %s14
      %p173 = scmp.lt.s32.totalorder %s14, 3
      %p174 = pnand %p172, %p173
      %p175 = pneg %p174
      // Predicated region
      $region25: #{tpu_custom_call.1} parent=5 // pred_check
        _
      $region26: #{tpu_custom_call.1} parent=5 // pred_check_branch
        %177 = sbr.rel (%p174) target = $region28
      $region27: #{tpu_custom_call.1} parent=5 // pred_region
        %s178 = ssub.s32 %s14, 1
        %s179 = sand.u32 %s41, 1
        %s180 = scalar_lea.sflag [#allocation3], %s179
        %s181 = sand.u32 %s41, 1
        %s182 = smul.addr %s181, 8
        %s183 = scalar_lea.vmem [#allocation2], %s182
        // Predicated region
        $region29: #{tpu_custom_call.1} parent=27 // pred_check
          %p184 = pneg %p54
        $region30: #{tpu_custom_call.1} parent=27 // pred_check_branch
          %186 = sbr.rel (%p184) target = $region32
        $region31: #{tpu_custom_call.1} parent=27 // pred_region
          %187 = dma.done %s180, 128
        $region32: #{tpu_custom_call.1} parent=27 // pred_fallthru
          _
        %s188 = sand.u32 %s71, 1
        %s189 = scalar_lea.sflag [#allocation5], %s188
        %s190 = sand.u32 %s71, 1
        %s191 = smul.addr %s190, 8
        %s192 = scalar_lea.vmem [#allocation4], %s191
        // Predicated region
        $region33: #{tpu_custom_call.1} parent=27 // pred_check
          %p193 = pneg %p84
        $region34: #{tpu_custom_call.1} parent=27 // pred_check_branch
          %195 = sbr.rel (%p193) target = $region36
        $region35: #{tpu_custom_call.1} parent=27 // pred_region
          %196 = dma.done %s189, 128
        $region36: #{tpu_custom_call.1} parent=27 // pred_fallthru
          _
        %s197 = sand.u32 %s41, 1
        %s198 = scalar_lea.sflag [#allocation3], %s197
        %s199 = sand.u32 %s41, 1
        %s200 = smul.addr %s199, 8
        %s201 = scalar_lea.vmem [#allocation2], %s200
        %p202 = pneg %p54
        %p203 = pneg %p51
        %s204 = sand.u32 %s71, 1
        %s205 = scalar_lea.sflag [#allocation5], %s204
        %s206 = sand.u32 %s71, 1
        %s207 = smul.addr %s206, 8
        %s208 = scalar_lea.vmem [#allocation4], %s207
        %p209 = pneg %p84
        %p210 = pneg %p81
        %p211 = pneg %p112
        %p212 = pneg %p109
        %p213 = scmp.lt.s32.totalorder %s23, 1
        %s214 = scalar_select %p213, %s23, 1
        %p215 = scmp.lt.s32.totalorder %s24, 0
        %s216 = scalar_select %p215, %s24, 0
        %s217 = smul.addr %s216, 2
        %s218 = smul.addr %s214, 2
        %s219 = sadd.s32 %s217, %s218
        %s220 = smul.addr %s219, 8
        %s221 = scalar_lea.vmem %s2, %s220
        %s222 = sadd.s32 %s24, 1
        %p223 = scmp.lt.s32.totalorder %s23, 1
        %s224 = scalar_select %p223, %s23, 1
        %p225 = scmp.lt.s32.totalorder %s24, 0
        %s226 = scalar_select %p225, %s24, 0
        %s227 = smul.addr %s226, 2
        %s228 = smul.addr %s224, 2
        %s229 = sadd.s32 %s227, %s228
        %s230 = smul.addr %s229, 8
        %s231 = scalar_lea.vmem %s2, %s230
        %v232 = vld [vmem:[%s183] sm:$0xff]
        %v233 = vld [vmem:[%s192] sm:$0xf]
        %235 = vrot.lane.b32.xlu0 %v232, 127
        %v236 = vpop.permute.xlu0 %235
        %239 = vrot.lane.b32.xlu0 %v233, 127
        %v240 = vpop.permute.xlu0 %239
        %vm242 = vcmask 1039360
        %v243 = vsel %vm242, %v236, %v240
        %vm244 = vcmask 1043456
        %v245 = vsel %vm244, %v243, 1.0
        %s246 = smul.u32 %s24, 128
        %v247 = vlaneseq
        %v248 = vand.u32 %v247, 127
        %v249 = vstv %s246
        %v250 = vadd.s32 %v249, %v248
        %vm251 = vcmp.lt.s32.totalorder %v250, 8
        %v252 = vsel %vm251, %v232, 0.0
        %v253 = vsel %vm251, %v245, 0.0
        %254 = vmatprep.subr.mxu0 0.0
        %255 = vmatpush1.xpose.msra.mxu0 %v252
        %256 = vmatprep.subr.mxu0 0.0
        %257 = vmatpush1.xpose.msra.mxu0 %v253
        %258 = vmatprep.subr.mxu0 0.0
        %259 = vmatpush1.xpose.msra.mxu0 0.0
        %260 = vmatprep.subr.mxu0 0.0
        %261 = vmatpush1.xpose.msra.mxu0 0.0
        %262 = vmatprep.subr.mxu0 0.0
        %263 = vmatpush1.xpose.msra.mxu0 0.0
        %264 = vmatprep.subr.mxu0 0.0
        %265 = vmatpush1.xpose.msra.mxu0 0.0
        %266 = vmatprep.subr.mxu0 0.0
        %267 = vmatpush1.xpose.msra.mxu0 0.0
        %268 = vmatprep.subr.mxu0 0.0
        %269 = vmatpush1.xpose.msra.mxu0 0.0
        %270 = vmatprep.subr.mxu0 0.0
        %271 = vmatpush1.xpose.msra.mxu0 0.0
        %272 = vmatprep.subr.mxu0 0.0
        %273 = vmatpush1.xpose.msra.mxu0 0.0
        %274 = vmatprep.subr.mxu0 0.0
        %275 = vmatpush1.xpose.msra.mxu0 0.0
        %276 = vmatprep.subr.mxu0 0.0
        %277 = vmatpush1.xpose.msra.mxu0 0.0
        %278 = vmatprep.subr.mxu0 0.0
        %279 = vmatpush1.xpose.msra.mxu0 0.0
        %280 = vmatprep.subr.mxu0 0.0
        %281 = vmatpush1.xpose.msra.mxu0 0.0
        %282 = vmatprep.subr.mxu0 0.0
        %283 = vmatpush1.xpose.msra.mxu0 0.0
        %284 = vmatprep.subr.mxu0 0.0
        %285 = vmatpush1.xpose.msra.mxu0 0.0
        %286 = vmatprep.subr.mxu0 0.0
        %287 = vmatpush1.xpose.msra.mxu0 0.0
        %288 = vmatprep.subr.mxu0 0.0
        %289 = vmatpush1.xpose.msra.mxu0 0.0
        %290 = vmatprep.subr.mxu0 0.0
        %291 = vmatpush1.xpose.msra.mxu0 0.0
        %292 = vmatprep.subr.mxu0 0.0
        %293 = vmatpush1.xpose.msra.mxu0 0.0
        %294 = vmatprep.subr.mxu0 0.0
        %295 = vmatpush1.xpose.msra.mxu0 0.0
        %296 = vmatprep.subr.mxu0 0.0
        %297 = vmatpush1.xpose.msra.mxu0 0.0
        %298 = vmatprep.subr.mxu0 0.0
        %299 = vmatpush1.xpose.msra.mxu0 0.0
        %300 = vmatprep.subr.mxu0 0.0
        %301 = vmatpush1.xpose.msra.mxu0 0.0
        %302 = vmatprep.subr.mxu0 0.0
        %303 = vmatpush1.xpose.msra.mxu0 0.0
        %304 = vmatprep.subr.mxu0 0.0
        %305 = vmatpush1.xpose.msra.mxu0 0.0
        %306 = vmatprep.subr.mxu0 0.0
        %307 = vmatpush1.xpose.msra.mxu0 0.0
        %308 = vmatprep.subr.mxu0 0.0
        %309 = vmatpush1.xpose.msra.mxu0 0.0
        %310 = vmatprep.subr.mxu0 0.0
        %311 = vmatpush1.xpose.msra.mxu0 0.0
        %312 = vmatprep.subr.mxu0 0.0
        %313 = vmatpush1.xpose.msra.mxu0 0.0
        %314 = vmatprep.subr.mxu0 0.0
        %315 = vmatpush1.xpose.msra.mxu0 0.0
        %316 = vmatprep.subr.mxu0 0.0
        %317 = vmatpush1.xpose.msra.mxu0 0.0
        %318 = vmatprep.mubr.f32.mxu0 0.0
        %319 = vmatmul.mubr.f32.gmra.mrb[0].mxu0 %v252
        %v320 = vpop.f32.mrb[0].mxu0
        %v321 = vadd.f32 0.0, %v320
        %v322 = vpop.f32.mrb[0].mxu0
        %323 = vmatprep.mubr.f32.mxu0 0.0
        %324 = vmatmul.mubr.f32.gmra.mrb[0].mxu0 %v253
        %v325 = vpop.f32.mrb[0].mxu0
        %v326 = vadd.f32 0.0, %v325
        %v327 = vpop.f32.mrb[0].mxu0
        %328 = vdwg.mxu0
        %vm329 = vcmask 105472
        %330 = vst.msk [vmem:[%s231] sm:$0xff] %vm329, %v321
        %vm331 = vcmask 102400
        %332 = vst.msk [vmem:[%s231 + $0x8] sm:$0x1f] %vm331, %v326
        %p333 = scmp.lt.s32.totalorder %s23, 1
        %s334 = scalar_select %p333, %s23, 1
        %p335 = scmp.lt.s32.totalorder %s24, 0
        %s336 = scalar_select %p335, %s24, 0
        %s337 = smul.addr %s336, 2
        %s338 = smul.addr %s334, 2
        %s339 = sadd.s32 %s337, %s338
        %s340 = smul.addr %s339, 8
        %s341 = scalar_lea.vmem %s2, %s340
        // Predicated region
        $region37: #{tpu_custom_call.1} parent=27 // pred_check
          %p342 = pneg %p109
        $region38: #{tpu_custom_call.1} parent=27 // pred_check_branch
          %344 = sbr.rel (%p342) target = $region40
        $region39: #{tpu_custom_call.1} parent=27 // pred_region
          _
        $region40: #{tpu_custom_call.1} parent=27 // pred_fallthru
          _
      $region28: #{tpu_custom_call.1} parent=5 // pred_fallthru
        _
      %p345 = scmp.le.s32.totalorder 2, %s14
      // Predicated region
      $region41: #{tpu_custom_call.1} parent=5 // pred_check
        %p346 = pneg %p345
      $region42: #{tpu_custom_call.1} parent=5 // pred_check_branch
        %348 = sbr.rel (%p346) target = $region44
      $region43: #{tpu_custom_call.1} parent=5 // pred_region
        %s349 = ssub.s32 %s14, 2
        // Predicated region
        $region45: #{tpu_custom_call.1} parent=43 // pred_check
          %p350 = pneg %p115
        $region46: #{tpu_custom_call.1} parent=43 // pred_check_branch
          %352 = sbr.rel (%p350) target = $region48
        $region47: #{tpu_custom_call.1} parent=43 // pred_region
          %p353 = scmp.lt.s32.totalorder %s25, 1
          %s354 = scalar_select %p353, %s25, 1
          %p355 = scmp.lt.s32.totalorder %s26, 0
          %s356 = scalar_select %p355, %s26, 0
          %s357 = smul.addr %s356, 2
          %s358 = smul.addr %s354, 2
          %s359 = sadd.s32 %s357, %s358
          %s360 = smul.addr %s359, 8
          %s361 = scalar_lea.vmem %s2, %s360
        $region48: #{tpu_custom_call.1} parent=43 // pred_fallthru
          _
      $region44: #{tpu_custom_call.1} parent=5 // pred_fallthru
        _
    $region6: #{tpu_custom_call.1} parent=1 // loop_footer
      %s18 = sadd.s32 1, %s14
    $region7: #{tpu_custom_call.1} parent=1 // loop_footer_branch
      %13 = sbr.rel target = $region3
    $region8: #{tpu_custom_call.1} parent=1 // loop_exit
      _
    %362 = vsyncpa [#allocation3], 1
    %s363 = scalar_lea.sflag [#allocation3], 1
    %364 = vsyncpa %s363, 1
    %365 = vsyncpa [#allocation5], 1
    %s366 = scalar_lea.sflag [#allocation5], 1
    %367 = vsyncpa %s366, 1

</llo_original>
